<compile_context>
chip_gen: v6e
topology: v6e:2x2x1
jax: 0.10.0
libtpu: 0.0.40
codegen_flags: <defaults>
</compile_context>

<pallas_src>
import functools
import math

import jax
import jax.numpy as jnp
from jax.experimental import pallas as pl
from jax.experimental.pallas import tpu as pltpu


_LANE = 128


def _per_input_block_bytes():
    """Per-generation HBM-block budget per input (stays inside default scoped VMEM)."""
    try:
        kind = jax.devices()[0].device_kind.lower()
    except Exception:  # pragma: no cover - defensive
        return 2 << 20
    if "v5 lite" in kind or "v5e" in kind or "v5lite" in kind:
        return 2 << 20  # 16 MiB default scoped VMEM: 2 inputs x 2 bufs x 2 MiB = 8 MiB
    if "v6" in kind or "trillium" in kind:
        return 4 << 20  # 32 MiB default scoped VMEM
    if "7x" in kind or "v7" in kind:
        return 4 << 20  # 64 MiB physical / 32 MiB default scoped per TC
    return 2 << 20      # conservative default for unknown chips


def _sublane_multiple(dtype):
    """Native sublane packing multiple for a dtype (8 f32, 16 bf16, 32 int8)."""
    return max(8, 32 // jnp.dtype(dtype).itemsize)


def _floss_kernel(p_ref, t_ref, o_ref, tp_acc, sp_acc, st_acc, *,
                  beta, log_like, d_total, td, mask_tail):
    """grid = (batch-block b, feature-tile k); k is the reduction axis (last)."""
    k = pl.program_id(1)
    nk = pl.num_programs(1)

    @pl.when(k == 0)
    def _():
        tp_acc[...] = jnp.zeros_like(tp_acc)
        sp_acc[...] = jnp.zeros_like(sp_acc)
        st_acc[...] = jnp.zeros_like(st_acc)

    # DMA in original dtype; cast on the VPU (hidden under the DMA).
    p = p_ref[...].astype(jnp.float32)
    t = t_ref[...].astype(jnp.float32)

    def accumulate(pp, tt):
        # Three fused per-sample reductions; beta is applied in the epilogue.
        tp_acc[...] += jnp.sum(pp * tt, axis=1, keepdims=True)
        sp_acc[...] += jnp.sum(pp, axis=1, keepdims=True)
        st_acc[...] += jnp.sum(tt, axis=1, keepdims=True)

    if mask_tail:
        # Pay for the mask only on the final (partial) feature tile.
        @pl.when(k < nk - 1)
        def _():
            accumulate(p, t)

        @pl.when(k == nk - 1)
        def _():
            col = jax.lax.broadcasted_iota(jnp.int32, p.shape, 1) + k * td
            valid = col < d_total
            accumulate(jnp.where(valid, p, 0.0), jnp.where(valid, t, 0.0))
    else:
        accumulate(p, t)

    @pl.when(k == nk - 1)
    def _():
        EPS = 1e-10
        h = beta * st_acc[...] + sp_acc[...]
        fmeasure = (1.0 + beta) * tp_acc[...] / (h + EPS)
        if log_like:
            # TODO(synk): like the PyTorch reference, TP == 0 yields -log(0) = inf.
            floss = -jnp.log(fmeasure)
        else:
            floss = 1.0 - fmeasure
        o_ref[...] = floss  # (TB, 1) per-sample losses, written once per batch block


def floss_pallas(prediction, target, beta=0.3, log_like=False, block_bytes=None):
    """Pallas implementation of FLoss.forward. Inputs: N-leading (e.g. NCHW)."""
    assert prediction.shape == target.shape
    N = prediction.shape[0]
    D = math.prod(prediction.shape[1:])

    # Free reshape only — no cast, no pad, no extra HBM pass.
    p2 = prediction.reshape(N, D)
    t2 = target.reshape(N, D)

    p_item = jnp.dtype(prediction.dtype).itemsize
    t_item = jnp.dtype(target.dtype).itemsize
    itemsize = max(p_item, t_item)
    sub = max(_sublane_multiple(prediction.dtype), _sublane_multiple(target.dtype))

    if block_bytes is None:
        block_bytes = _per_input_block_bytes()
    max_elems = max(_LANE * sub, block_bytes // itemsize)

    # Feature tile TD: whole D if it fits (a full-extent dim is exempt from the
    # 128 rule); otherwise a lane-aligned tile sized so that >= `sub` samples
    # still fit per block, with the tail masked (last tile only) in-kernel.
    max_td = max(_LANE, (max_elems // sub) // _LANE * _LANE)
    TD = D if D <= max_td else max_td
    kd = pl.cdiv(D, TD)
    mask_tail = (D % TD) != 0

    # Batch tile TB: as many samples per step as the budget allows, rounded to
    # the dtype's native sublane multiple (or full batch).
    rows_fit = max(1, max_elems // TD)
    if rows_fit >= N:
        TB = N
    else:
        TB = max(sub, (rows_fit // sub) * sub)
    # Guarantee >=2 batch blocks when possible so v7x's second TensorCore gets
    # work via the "parallel" batch axis (harmless on 1-TC v5e/v6e).
    if TB >= N and N >= 2 * sub:
        half = -(-N // 2)             # ceil(N / 2)
        TB = -(-half // sub) * sub    # round up to sublane multiple
    nb = pl.cdiv(N, TB)

    # VMEM budget: 2 inputs x 2 pipeline buffers x block (+ tiny output/scratch).
    block_in_bytes = TB * TD * (p_item + t_item)
    needed = 2 * block_in_bytes + 2 * TB * 4 + 3 * TB * 4 + (2 << 20)
    vmem_limit = int(min(32 << 20, max(16 << 20, needed)))

    kernel = functools.partial(
        _floss_kernel,
        beta=float(beta),
        log_like=bool(log_like),
        d_total=D,
        td=TD,
        mask_tail=mask_tail,
    )

    cost = pl.CostEstimate(
        flops=4 * N * D,
        transcendentals=(N if log_like else 0),
        bytes_accessed=N * D * (p_item + t_item) + 4 * N,
    )

    per_sample = pl.pallas_call(
        kernel,
        out_shape=jax.ShapeDtypeStruct((N, 1), jnp.float32),
        grid=(nb, kd),
        in_specs=[
            pl.BlockSpec((TB, TD), lambda b, k: (b, k)),
            pl.BlockSpec((TB, TD), lambda b, k: (b, k)),
        ],
        # Output block depends only on b -> resident across the k reduction axis;
        # distinct batch blocks write distinct outputs, so b can be "parallel".
        out_specs=pl.BlockSpec((TB, 1), lambda b, k: (b, 0)),
        scratch_shapes=[
            pltpu.VMEM((TB, 1), jnp.float32),  # per-sample sum(p*t)
            pltpu.VMEM((TB, 1), jnp.float32),  # per-sample sum(p)
            pltpu.VMEM((TB, 1), jnp.float32),  # per-sample sum(t)
        ],
        compiler_params=pltpu.CompilerParams(
            dimension_semantics=("parallel", "arbitrary"),
            vmem_limit_bytes=vmem_limit,
        ),
        cost_estimate=cost,
    )(p2, t2)

    # Final mean over the batch (sum-then-divide, matching the reference order).
    return jnp.mean(per_sample)


def _floss_ref(prediction, target, beta=0.3, log_like=False):
    """Pure-JAX reference mirroring the PyTorch code."""
    EPS = 1e-10
    N = prediction.shape[0]
    p = prediction.reshape(N, -1).astype(jnp.float32)
    t = target.reshape(N, -1).astype(jnp.float32)
    TP = jnp.sum(p * t, axis=1)
    H = beta * jnp.sum(t, axis=1) + jnp.sum(p, axis=1)
    fmeasure = (1.0 + beta) * TP / (H + EPS)
    floss = -jnp.log(fmeasure) if log_like else 1.0 - fmeasure
    return jnp.mean(floss)


def _check(pred, targ, beta=0.3, log_like=False, block_bytes=None, tag=""):
    out = jax.block_until_ready(
        floss_pallas(pred, targ, beta=beta, log_like=log_like, block_bytes=block_bytes))
    ref = _floss_ref(pred, targ, beta=beta, log_like=log_like)
    assert jnp.allclose(out, ref, rtol=1e-5, atol=1e-6), (tag, out, ref)


if __name__ == "__main__":
    key = jax.random.PRNGKey(0)
    k1, k2, k3, k4 = jax.random.split(key, 4)

    # NCHW inputs, small shapes: batch=2, channels=4, spatial=16x16.
    shape = (2, 4, 16, 16)
    prediction = jax.nn.sigmoid(jax.random.normal(k1, shape, dtype=jnp.float32))
    target = (jax.random.uniform(k2, shape, dtype=jnp.float32) > 0.5).astype(jnp.float32)

    # Default path (single feature tile, single batch block).
    _check(prediction, target, log_like=False, tag="base")
    _check(prediction, target, log_like=True, tag="base_log")

    # Force multi-tile feature reduction (kd > 1, no tail).
    _check(prediction, target, block_bytes=8192, tag="ktiles")

    # Force multi-tile feature reduction with a masked tail (D = 4*15*16 = 960).
    shape2 = (2, 4, 15, 16)
    p2 = jax.nn.sigmoid(jax.random.normal(k3, shape2, dtype=jnp.float32))
    t2 = (jax.random.uniform(k4, shape2, dtype=jnp.float32) > 0.5).astype(jnp.float32)
    _check(p2, t2, block_bytes=8192, tag="tail_mask")

    # Batch large enough to split into >=2 batch blocks (v7x megacore path).
    shape3 = (16, 4, 16, 16)
    p3 = jax.nn.sigmoid(jax.random.normal(k3, shape3, dtype=jnp.float32))
    t3 = (jax.random.uniform(k4, shape3, dtype=jnp.float32) > 0.5).astype(jnp.float32)
    _check(p3, t3, tag="batch_split")

    print("KERNEL_OK")
</pallas_src>

<mosaic_0001>
module attributes {stable_mosaic.version = 11 : i64} {
  func.func @_floss_kernel(%arg0: i32, %arg1: i32, %arg2: memref<2x1024xf32, #tpu.memory_space<vmem>>, %arg3: memref<2x1024xf32, #tpu.memory_space<vmem>>, %arg4: memref<2x1xf32, #tpu.memory_space<vmem>>, %arg5: memref<2x1xf32, #tpu.memory_space<vmem>>, %arg6: memref<2x1xf32, #tpu.memory_space<vmem>>, %arg7: memref<2x1xf32, #tpu.memory_space<vmem>>) attributes {dimension_semantics = [#tpu.dimension_semantics<parallel>, #tpu.dimension_semantics<arbitrary>], iteration_bounds = array<i64: 1, 1>, scalar_prefetch = 0 : i64, scratch_operands = 3 : i64, tpu.core_type = #tpu.core_type<tc>, window_params = [{transform_indices = @transform_0, window_bounds = array<i64: 2, 1024>}, {transform_indices = @transform_1, window_bounds = array<i64: 2, 1024>}, {transform_indices = @transform_2, window_bounds = array<i64: 2, 1>}]} {
    %c0_i32 = arith.constant 0 : i32
    %0 = arith.cmpi eq, %arg1, %c0_i32 : i32
    %1 = arith.extui %0 : i1 to i32
    %c0_i32_0 = arith.constant 0 : i32
    %2 = arith.cmpi ne, %1, %c0_i32_0 : i32
    scf.if %2 {
      %cst_20 = arith.constant 0.000000e+00 : f32
      %24 = vector.broadcast %cst_20 : f32 to vector<2x1xf32>
      %c0_21 = arith.constant 0 : index
      %c0_22 = arith.constant 0 : index
      %25 = vector.load %arg5[%c0_21, %c0_22] : memref<2x1xf32, #tpu.memory_space<vmem>>, vector<2x1xf32>
      tpu.vector_store %arg5[%c0_21, %c0_22], %24 {strides = array<i32>} : memref<2x1xf32, #tpu.memory_space<vmem>>, vector<2x1xf32>,
      %cst_23 = arith.constant 0.000000e+00 : f32
      %26 = vector.broadcast %cst_23 : f32 to vector<2x1xf32>
      %c0_24 = arith.constant 0 : index
      %c0_25 = arith.constant 0 : index
      %27 = vector.load %arg6[%c0_24, %c0_25] : memref<2x1xf32, #tpu.memory_space<vmem>>, vector<2x1xf32>
      tpu.vector_store %arg6[%c0_24, %c0_25], %26 {strides = array<i32>} : memref<2x1xf32, #tpu.memory_space<vmem>>, vector<2x1xf32>,
      %cst_26 = arith.constant 0.000000e+00 : f32
      %28 = vector.broadcast %cst_26 : f32 to vector<2x1xf32>
      %c0_27 = arith.constant 0 : index
      %c0_28 = arith.constant 0 : index
      %29 = vector.load %arg7[%c0_27, %c0_28] : memref<2x1xf32, #tpu.memory_space<vmem>>, vector<2x1xf32>
      tpu.vector_store %arg7[%c0_27, %c0_28], %28 {strides = array<i32>} : memref<2x1xf32, #tpu.memory_space<vmem>>, vector<2x1xf32>,
    } else {
    }
    %c0 = arith.constant 0 : index
    %c0_1 = arith.constant 0 : index
    %3 = vector.load %arg2[%c0, %c0_1] : memref<2x1024xf32, #tpu.memory_space<vmem>>, vector<2x1024xf32>
    %c0_2 = arith.constant 0 : index
    %c0_3 = arith.constant 0 : index
    %4 = vector.load %arg3[%c0_2, %c0_3] : memref<2x1024xf32, #tpu.memory_space<vmem>>, vector<2x1024xf32>
    %c0_4 = arith.constant 0 : index
    %c0_5 = arith.constant 0 : index
    %5 = vector.load %arg5[%c0_4, %c0_5] : memref<2x1xf32, #tpu.memory_space<vmem>>, vector<2x1xf32>
    %6 = arith.mulf %3, %4 : vector<2x1024xf32>
    %cst = arith.constant dense<0.000000e+00> : vector<2xf32>
    %7 = vector.multi_reduction <add>, %6, %cst [1] : vector<2x1024xf32> to vector<2xf32>
    %8 = vector.shape_cast %7 : vector<2xf32> to vector<2x1xf32>
    %9 = arith.addf %5, %8 : vector<2x1xf32>
    %c0_6 = arith.constant 0 : index
    %c0_7 = arith.constant 0 : index
    %10 = vector.load %arg5[%c0_6, %c0_7] : memref<2x1xf32, #tpu.memory_space<vmem>>, vector<2x1xf32>
    tpu.vector_store %arg5[%c0_6, %c0_7], %9 {strides = array<i32>} : memref<2x1xf32, #tpu.memory_space<vmem>>, vector<2x1xf32>,
    %c0_8 = arith.constant 0 : index
    %c0_9 = arith.constant 0 : index
    %11 = vector.load %arg6[%c0_8, %c0_9] : memref<2x1xf32, #tpu.memory_space<vmem>>, vector<2x1xf32>
    %cst_10 = arith.constant dense<0.000000e+00> : vector<2xf32>
    %12 = vector.multi_reduction <add>, %3, %cst_10 [1] : vector<2x1024xf32> to vector<2xf32>
    %13 = vector.shape_cast %12 : vector<2xf32> to vector<2x1xf32>
    %14 = arith.addf %11, %13 : vector<2x1xf32>
    %c0_11 = arith.constant 0 : index
    %c0_12 = arith.constant 0 : index
    %15 = vector.load %arg6[%c0_11, %c0_12] : memref<2x1xf32, #tpu.memory_space<vmem>>, vector<2x1xf32>
    tpu.vector_store %arg6[%c0_11, %c0_12], %14 {strides = array<i32>} : memref<2x1xf32, #tpu.memory_space<vmem>>, vector<2x1xf32>,
    %c0_13 = arith.constant 0 : index
    %c0_14 = arith.constant 0 : index
    %16 = vector.load %arg7[%c0_13, %c0_14] : memref<2x1xf32, #tpu.memory_space<vmem>>, vector<2x1xf32>
    %cst_15 = arith.constant dense<0.000000e+00> : vector<2xf32>
    %17 = vector.multi_reduction <add>, %4, %cst_15 [1] : vector<2x1024xf32> to vector<2xf32>
    %18 = vector.shape_cast %17 : vector<2xf32> to vector<2x1xf32>
    %19 = arith.addf %16, %18 : vector<2x1xf32>
    %c0_16 = arith.constant 0 : index
    %c0_17 = arith.constant 0 : index
    %20 = vector.load %arg7[%c0_16, %c0_17] : memref<2x1xf32, #tpu.memory_space<vmem>>, vector<2x1xf32>
    tpu.vector_store %arg7[%c0_16, %c0_17], %19 {strides = array<i32>} : memref<2x1xf32, #tpu.memory_space<vmem>>, vector<2x1xf32>,
    %c0_i32_18 = arith.constant 0 : i32
    %21 = arith.cmpi eq, %arg1, %c0_i32_18 : i32
    %22 = arith.extui %21 : i1 to i32
    %c0_i32_19 = arith.constant 0 : i32
    %23 = arith.cmpi ne, %22, %c0_i32_19 : i32
    scf.if %23 {
      %c0_20 = arith.constant 0 : index
      %c0_21 = arith.constant 0 : index
      %24 = vector.load %arg7[%c0_20, %c0_21] : memref<2x1xf32, #tpu.memory_space<vmem>>, vector<2x1xf32>
      %cst_22 = arith.constant 3.000000e-01 : f32
      %25 = vector.broadcast %cst_22 : f32 to vector<2x1xf32>
      %26 = arith.mulf %25, %24 : vector<2x1xf32>
      %c0_23 = arith.constant 0 : index
      %c0_24 = arith.constant 0 : index
      %27 = vector.load %arg6[%c0_23, %c0_24] : memref<2x1xf32, #tpu.memory_space<vmem>>, vector<2x1xf32>
      %28 = arith.addf %26, %27 : vector<2x1xf32>
      %c0_25 = arith.constant 0 : index
      %c0_26 = arith.constant 0 : index
      %29 = vector.load %arg5[%c0_25, %c0_26] : memref<2x1xf32, #tpu.memory_space<vmem>>, vector<2x1xf32>
      %cst_27 = arith.constant 1.300000e+00 : f32
      %30 = vector.broadcast %cst_27 : f32 to vector<2x1xf32>
      %31 = arith.mulf %30, %29 : vector<2x1xf32>
      %cst_28 = arith.constant 1.000000e-10 : f32
      %32 = vector.broadcast %cst_28 : f32 to vector<2x1xf32>
      %33 = arith.addf %28, %32 : vector<2x1xf32>
      %34 = arith.divf %31, %33 : vector<2x1xf32>
      %cst_29 = arith.constant 1.000000e+00 : f32
      %35 = vector.broadcast %cst_29 : f32 to vector<2x1xf32>
      %36 = arith.subf %35, %34 : vector<2x1xf32>
      %c0_30 = arith.constant 0 : index
      %c0_31 = arith.constant 0 : index
      %37 = vector.load %arg4[%c0_30, %c0_31] : memref<2x1xf32, #tpu.memory_space<vmem>>, vector<2x1xf32>
      tpu.vector_store %arg4[%c0_30, %c0_31], %36 {strides = array<i32>} : memref<2x1xf32, #tpu.memory_space<vmem>>, vector<2x1xf32>,
    } else {
    }
    return
  }
  func.func @transform_0(%arg0: i32, %arg1: i32) -> (i32, i32) {
    %c0_i32 = arith.constant 0 : i32
    return %arg0, %arg1 : i32, i32
  }
  func.func @transform_1(%arg0: i32, %arg1: i32) -> (i32, i32) {
    %c0_i32 = arith.constant 0 : i32
    return %arg0, %arg1 : i32, i32
  }
  func.func @transform_2(%arg0: i32, %arg1: i32) -> (i32, i32) {
    %c0_i32 = arith.constant 0 : i32
    %c0_i32_0 = arith.constant 0 : i32
    return %arg0, %c0_i32 : i32, i32
  }
}

</mosaic_0001>

<llo_original>
// kernel: tpu_custom_call.1
$region0: #{tpu_custom_call.1}
  #allocation0 [shape = 'u32[]', space=smem, size = 0x4, offset = 0x4, fixed_abs, tag = 'smem constant byte address 0x4 - core index']
  #allocation1 [shape = 'u32[144,128]{1,0:T(1,128)}', space=vmem, size = 0x12000, scoped, tag = 'internal scratch']
  #allocation2 [shape = 'f32[2,1]{1,0:T(2,128)}', space=vmem, size = 0x400, scoped, tag = 'scratch operand']
  #allocation3 [shape = 'f32[2,1]{1,0:T(2,128)}', space=vmem, size = 0x400, scoped, tag = 'scratch operand']
  #allocation4 [shape = 'f32[2,1]{1,0:T(2,128)}', space=vmem, size = 0x400, scoped, tag = 'scratch operand']
  %s0 = inlined_call_operand.hbm [shape: f32[2,1024], index: 0, kind: input, shape index: {}]
  %s1 = inlined_call_operand.hbm [shape: f32[2,1024], index: 1, kind: input, shape index: {}]
  %s2 = inlined_call_operand.vmem [shape: f32[2,1], index: 2, kind: output, shape index: {}]
  %s3 = sld [smem:[#allocation0]]
  $region34: #{tpu_custom_call.1} parent=0
    _
  %s5 = ssub.s32 1, %s3
  %s6 = scalar_select 0, %s5, %s3
  $region1: #{tpu_custom_call.1} parent=0
    #allocation5 [shape = 'u8[8192]{0}', space=vmem, size = 0x2000, scoped, tag = 'input window, operand 0, single buffered']
    #allocation6 [shape = 's32[1]{0}', space=sflag, size = 0x4, scoped, tag = 'scoped memory for tpu_custom_call.1']
    #allocation7 [shape = 'u8[8192]{0}', space=vmem, size = 0x2000, scoped, tag = 'input window, operand 1, single buffered']
    #allocation8 [shape = 's32[1]{0}', space=sflag, size = 0x4, scoped, tag = 'scoped memory for tpu_custom_call.1']
    %7 = vsyncpa [#allocation6], 0
    %8 = vsyncpa [#allocation8], 0
    // Predicated region
    $region2: #{tpu_custom_call.1} parent=1 // pred_check
      _
    $region3: #{tpu_custom_call.1} parent=1 // pred_check_branch
      %10 = sbr.rel (0) target = $region5
    $region4: #{tpu_custom_call.1} parent=1 // pred_region
      %s12 = ssub.s32 256, 256
      %13 = vsyncadd [#allocation6], %s12
      %s15 = sshll.u32 [#allocation5], 4
      %s16 = int_to_ptr.vmem [resolvable:$true] %s15
      %18 = dma.hbm_to_vmem [thread:$0]  %s0, 256, %s16, [#allocation6]
    $region5: #{tpu_custom_call.1} parent=1 // pred_fallthru
      _
    // Predicated region
    $region6: #{tpu_custom_call.1} parent=1 // pred_check
      _
    $region7: #{tpu_custom_call.1} parent=1 // pred_check_branch
      %20 = sbr.rel (0) target = $region9
    $region8: #{tpu_custom_call.1} parent=1 // pred_region
      %s22 = ssub.s32 256, 256
      %23 = vsyncadd [#allocation8], %s22
      %s25 = sshll.u32 [#allocation7], 4
      %s26 = int_to_ptr.vmem [resolvable:$true] %s25
      %28 = dma.hbm_to_vmem [thread:$0]  %s1, 256, %s26, [#allocation8]
    $region9: #{tpu_custom_call.1} parent=1 // pred_fallthru
      _
    // Predicated region
    $region10: #{tpu_custom_call.1} parent=1 // pred_check
      _
    $region11: #{tpu_custom_call.1} parent=1 // pred_check_branch
      %30 = sbr.rel (0) target = $region13
    $region12: #{tpu_custom_call.1} parent=1 // pred_region
      %31 = dma.done [#allocation6], 256
    $region13: #{tpu_custom_call.1} parent=1 // pred_fallthru
      _
    // Predicated region
    $region14: #{tpu_custom_call.1} parent=1 // pred_check
      _
    $region15: #{tpu_custom_call.1} parent=1 // pred_check_branch
      %33 = sbr.rel (0) target = $region17
    $region16: #{tpu_custom_call.1} parent=1 // pred_region
      %34 = dma.done [#allocation8], 256
    $region17: #{tpu_custom_call.1} parent=1 // pred_fallthru
      _
    %p35 = scmp.eq.s32.totalorder 0, 0
    // Predicated region
    $region18: #{tpu_custom_call.1} parent=1 // pred_check
      %p36 = pneg %p35
    $region19: #{tpu_custom_call.1} parent=1 // pred_check_branch
      %38 = sbr.rel (%p36) target = $region21
    $region20: #{tpu_custom_call.1} parent=1 // pred_region
      %vm39 = vcmask 1024
      %40 = vst.msk [vmem:[#allocation2] sm:$0x3] %vm39, 0.0
      %41 = vst.msk [vmem:[#allocation3] sm:$0x3] %vm39, 0.0
      %42 = vst.msk [vmem:[#allocation4] sm:$0x3] %vm39, 0.0
    $region21: #{tpu_custom_call.1} parent=1 // pred_fallthru
      _
    %v43 = vld [vmem:[#allocation5] sm:$0xff]
    %v44 = vld [vmem:[#allocation5 + $0x8] sm:$0xff]
    %v45 = vld [vmem:[#allocation7] sm:$0xff]
    %v46 = vld [vmem:[#allocation7 + $0x8] sm:$0xff]
    %v47 = vld [vmem:[#allocation2] sm:$0x3]
    %v48 = vmul.f32 %v43, %v45
    %v49 = vmul.f32 %v44, %v46
    %v52 = vcombine.high %v48, %v48
    %v54 = vunpack.c.l.s4 1983009808
    %v55 = vunpack.c.0.s8 %v54
    %v56 = vlaneseq
    %v57 = vshrl.u32 %v56, 7
    %v58 = vsub.s32 %v55, %v57
    %v59 = vrot.slane %v48, %v58
    %v61 = vunpack.c.l.s4 1983009808
    %v62 = vunpack.c.0.s8 %v61
    %v63 = vlaneseq
    %v64 = vshrl.u32 %v63, 7
    %v65 = vsub.s32 %v62, %v64
    %v66 = vrot.slane %v52, %v65
    %v67 = vcombine.high %v59, %v59
    %v68 = vcombine.high %v66, %v66
    %v69 = vcombine.high %v49, %v49
    %v71 = vunpack.c.l.s4 1983009808
    %v72 = vunpack.c.0.s8 %v71
    %v73 = vlaneseq
    %v74 = vshrl.u32 %v73, 7
    %v75 = vsub.s32 %v72, %v74
    %v76 = vrot.slane %v49, %v75
    %v78 = vunpack.c.l.s4 1983009808
    %v79 = vunpack.c.0.s8 %v78
    %v80 = vlaneseq
    %v81 = vshrl.u32 %v80, 7
    %v82 = vsub.s32 %v79, %v81
    %v83 = vrot.slane %v69, %v82
    %v84 = vcombine.high %v76, %v76
    %v85 = vcombine.high %v83, %v83
    %vm94 = vcmask 1041408
    %v95 = vsel %vm94, %v59, 0.0
    %v96 = vsel %vm94, %v67, 0.0
    %v97 = vadd.f32 %v95, %v96
    %v98 = vsel %vm94, %v66, 0.0
    %v99 = vadd.f32 %v97, %v98
    %v100 = vsel %vm94, %v68, 0.0
    %v101 = vadd.f32 %v99, %v100
    %v102 = vsel %vm94, %v76, 0.0
    %v103 = vadd.f32 %v101, %v102
    %v104 = vsel %vm94, %v84, 0.0
    %v105 = vadd.f32 %v103, %v104
    %v106 = vsel %vm94, %v83, 0.0
    %v107 = vadd.f32 %v105, %v106
    %v108 = vsel %vm94, %v85, 0.0
    %v109 = vadd.f32 %v107, %v108
    %110 = vadd.xlane.f32.xlu0 %v109
    %v111 = vpop.xlane.xlu0 %110
    %v112 = vadd.f32 %v47, %v111
    %vm113 = vcmask 1024
    %114 = vst.msk [vmem:[#allocation2] sm:$0x3] %vm113, %v112
    %v115 = vld [vmem:[#allocation3] sm:$0x3]
    %v118 = vcombine.high %v43, %v43
    %v120 = vunpack.c.l.s4 1983009808
    %v121 = vunpack.c.0.s8 %v120
    %v122 = vlaneseq
    %v123 = vshrl.u32 %v122, 7
    %v124 = vsub.s32 %v121, %v123
    %v125 = vrot.slane %v43, %v124
    %v127 = vunpack.c.l.s4 1983009808
    %v128 = vunpack.c.0.s8 %v127
    %v129 = vlaneseq
    %v130 = vshrl.u32 %v129, 7
    %v131 = vsub.s32 %v128, %v130
    %v132 = vrot.slane %v118, %v131
    %v133 = vcombine.high %v125, %v125
    %v134 = vcombine.high %v132, %v132
    %v135 = vcombine.high %v44, %v44
    %v137 = vunpack.c.l.s4 1983009808
    %v138 = vunpack.c.0.s8 %v137
    %v139 = vlaneseq
    %v140 = vshrl.u32 %v139, 7
    %v141 = vsub.s32 %v138, %v140
    %v142 = vrot.slane %v44, %v141
    %v144 = vunpack.c.l.s4 1983009808
    %v145 = vunpack.c.0.s8 %v144
    %v146 = vlaneseq
    %v147 = vshrl.u32 %v146, 7
    %v148 = vsub.s32 %v145, %v147
    %v149 = vrot.slane %v135, %v148
    %v150 = vcombine.high %v142, %v142
    %v151 = vcombine.high %v149, %v149
    %v160 = vsel %vm94, %v125, 0.0
    %v161 = vsel %vm94, %v133, 0.0
    %v162 = vadd.f32 %v160, %v161
    %v163 = vsel %vm94, %v132, 0.0
    %v164 = vadd.f32 %v162, %v163
    %v165 = vsel %vm94, %v134, 0.0
    %v166 = vadd.f32 %v164, %v165
    %v167 = vsel %vm94, %v142, 0.0
    %v168 = vadd.f32 %v166, %v167
    %v169 = vsel %vm94, %v150, 0.0
    %v170 = vadd.f32 %v168, %v169
    %v171 = vsel %vm94, %v149, 0.0
    %v172 = vadd.f32 %v170, %v171
    %v173 = vsel %vm94, %v151, 0.0
    %v174 = vadd.f32 %v172, %v173
    %175 = vadd.xlane.f32.xlu0 %v174
    %v176 = vpop.xlane.xlu0 %175
    %v177 = vadd.f32 %v115, %v176
    %178 = vst.msk [vmem:[#allocation3] sm:$0x3] %vm113, %v177
    %v179 = vld [vmem:[#allocation4] sm:$0x3]
    %v182 = vcombine.high %v45, %v45
    %v184 = vunpack.c.l.s4 1983009808
    %v185 = vunpack.c.0.s8 %v184
    %v186 = vlaneseq
    %v187 = vshrl.u32 %v186, 7
    %v188 = vsub.s32 %v185, %v187
    %v189 = vrot.slane %v45, %v188
    %v191 = vunpack.c.l.s4 1983009808
    %v192 = vunpack.c.0.s8 %v191
    %v193 = vlaneseq
    %v194 = vshrl.u32 %v193, 7
    %v195 = vsub.s32 %v192, %v194
    %v196 = vrot.slane %v182, %v195
    %v197 = vcombine.high %v189, %v189
    %v198 = vcombine.high %v196, %v196
    %v199 = vcombine.high %v46, %v46
    %v201 = vunpack.c.l.s4 1983009808
    %v202 = vunpack.c.0.s8 %v201
    %v203 = vlaneseq
    %v204 = vshrl.u32 %v203, 7
    %v205 = vsub.s32 %v202, %v204
    %v206 = vrot.slane %v46, %v205
    %v208 = vunpack.c.l.s4 1983009808
    %v209 = vunpack.c.0.s8 %v208
    %v210 = vlaneseq
    %v211 = vshrl.u32 %v210, 7
    %v212 = vsub.s32 %v209, %v211
    %v213 = vrot.slane %v199, %v212
    %v214 = vcombine.high %v206, %v206
    %v215 = vcombine.high %v213, %v213
    %v224 = vsel %vm94, %v189, 0.0
    %v225 = vsel %vm94, %v197, 0.0
    %v226 = vadd.f32 %v224, %v225
    %v227 = vsel %vm94, %v196, 0.0
    %v228 = vadd.f32 %v226, %v227
    %v229 = vsel %vm94, %v198, 0.0
    %v230 = vadd.f32 %v228, %v229
    %v231 = vsel %vm94, %v206, 0.0
    %v232 = vadd.f32 %v230, %v231
    %v233 = vsel %vm94, %v214, 0.0
    %v234 = vadd.f32 %v232, %v233
    %v235 = vsel %vm94, %v213, 0.0
    %v236 = vadd.f32 %v234, %v235
    %v237 = vsel %vm94, %v215, 0.0
    %v238 = vadd.f32 %v236, %v237
    %239 = vadd.xlane.f32.xlu0 %v238
    %v240 = vpop.xlane.xlu0 %239
    %v241 = vadd.f32 %v179, %v240
    %242 = vst.msk [vmem:[#allocation4] sm:$0x3] %vm113, %v241
    // Predicated region
    $region22: #{tpu_custom_call.1} parent=1 // pred_check
      %p243 = pneg %p35
    $region23: #{tpu_custom_call.1} parent=1 // pred_check_branch
      %245 = sbr.rel (%p243) target = $region25
    $region24: #{tpu_custom_call.1} parent=1 // pred_region
      %v246 = vld [vmem:[#allocation4] sm:$0x3]
      %v247 = vmul.f32 %v246, 0.3
      %v248 = vld [vmem:[#allocation3] sm:$0x3]
      %v249 = vadd.f32 %v247, %v248
      %v250 = vld [vmem:[#allocation2] sm:$0x3]
      %v251 = vmul.f32 %v250, 1.3
      %v252 = vadd.f32 %v249, 1e-10
      %v253 = vrcp.pop %v252
      %v254 = vmul.f32 %v251, %v253
      %v255 = vsub.f32 1.0, %v254
      %256 = vst.msk [vmem:[%s2] sm:$0x3] %vm113, %v255
    $region25: #{tpu_custom_call.1} parent=1 // pred_fallthru
      _
    // Predicated region
    $region26: #{tpu_custom_call.1} parent=1 // pred_check
      _
    $region27: #{tpu_custom_call.1} parent=1 // pred_check_branch
      %258 = sbr.rel (0) target = $region29
    $region28: #{tpu_custom_call.1} parent=1 // pred_region
      _
    $region29: #{tpu_custom_call.1} parent=1 // pred_fallthru
      _
    // Predicated region
    $region30: #{tpu_custom_call.1} parent=1 // pred_check
      _
    $region31: #{tpu_custom_call.1} parent=1 // pred_check_branch
      %260 = sbr.rel (0) target = $region33
    $region32: #{tpu_custom_call.1} parent=1 // pred_region
      _
    $region33: #{tpu_custom_call.1} parent=1 // pred_fallthru
      _
    %261 = vsyncpa [#allocation6], 1
    %262 = vsyncpa [#allocation8], 1

</llo_original>
